<compile_context>
chip_gen: v6e
topology: v6e:2x2x1
jax: 0.10.0
libtpu: 0.0.40
codegen_flags: <defaults>
</compile_context>

<pallas_src>
import jax
import jax.numpy as jnp
from jax.experimental import pallas as pl
from jax.experimental.pallas import tpu as pltpu

DROPOUT_P = 0.4
KEEP_SCALE = 1.0 / (1.0 - DROPOUT_P)   # plain Python float -> jaxpr literal

_MAX_TB = 4096          # max batch-tile (lane) width per grid step
_MULTISTEP_MIN_B = 1024  # above this, force >= 2 grid steps (v7x megacore)


def actor_kernel(xT_ref, bits_ref, w1_ref, b1_ref, w2_ref, b2_ref,
                 w3_ref, b3_ref, out_ref):
    # Batch-in-lanes layout: every activation is (feature, batch_tile).
    xT = xT_ref[...]                                            # (in_dim, TB)

    # fc1 + ReLU   (weights in native PyTorch (out, in) layout)
    h1 = jnp.dot(w1_ref[...], xT, preferred_element_type=jnp.float32) + b1_ref[...]
    h1 = jnp.maximum(h1, 0.0)

    # fc2 + ReLU
    h2 = jnp.dot(w2_ref[...], h1, preferred_element_type=jnp.float32) + b2_ref[...]
    h2 = jnp.maximum(h2, 0.0)

    # dropout(p=0.4), training-mode semantics.  One keep-bit per
    # (feature, batch column), packed 32-to-a-uint32-word; unpack with a
    # sublane iota + variable shift.  Only Python-scalar constants here.
    H, TB = h2.shape
    packed = bits_ref[...]                                      # (n_words, TB) uint32
    n_words = packed.shape[0]
    h_idx = jax.lax.broadcasted_iota(jnp.int32, (H, TB), 0)     # feature index
    bit_idx = (h_idx % 32).astype(jnp.uint32)
    keep = (packed[0:1, :] >> bit_idx) & 1                      # (H, TB) uint32 {0,1}
    for w in range(1, n_words):                                 # static loop; 1 word for H<=32
        keep = jnp.where(h_idx // 32 == w,
                         (packed[w:w + 1, :] >> bit_idx) & 1, keep)
    h2 = h2 * (keep.astype(jnp.float32) * KEEP_SCALE)

    # fc3 (logits, no activation)
    out = jnp.dot(w3_ref[...], h2, preferred_element_type=jnp.float32) + b3_ref[...]
    out_ref[...] = out.astype(out_ref.dtype)


def _choose_batch_tile(B):
    """Lane-dense batch tiles: as large as possible (per-step overhead ~0.35us
    dwarfs a 128-row DMA), capped at _MAX_TB columns; >=2 steps once the batch
    is big enough that splitting across v7x's two TensorCores pays off."""
    if B <= _MULTISTEP_MIN_B:
        return B
    n_steps = max(2, -(-B // _MAX_TB))
    tb = -(-B // n_steps)
    return -(-tb // 128) * 128          # round up to a lane multiple


@jax.jit
def actor_forward(x, params, dropout_key):
    """x: (B, input_size) f32.  params: output of prepare_params().
    dropout_key: jax PRNG key (pass a fresh/step-varying key per call so the
    dropout mask changes between forward passes).  Returns logits (B, out).
    Dropout is always active (training-mode), matching the PyTorch forward."""
    B, in_dim = x.shape
    H = params["w2"].shape[0]
    out_dim = params["w3"].shape[0]
    n_words = -(-H // 32)

    # Bernoulli(keep=1-p) mask, bit-packed: one uint32 per 32 hidden features
    # per batch element -> 32x less HBM traffic than an int32 (B,H) tensor.
    keep = jax.random.bernoulli(dropout_key, 1.0 - DROPOUT_P, (B, n_words * 32))
    pw = jnp.left_shift(jnp.ones((), jnp.uint32),
                        jnp.arange(32, dtype=jnp.uint32))        # powers of two
    packed = jnp.sum(keep.reshape(B, n_words, 32).astype(jnp.uint32) * pw,
                     axis=-1, dtype=jnp.uint32)                  # (B, n_words)
    packedT = packed.T                                           # (n_words, B)

    xT = x.T                                                     # (in_dim, B), batch in lanes

    TB = _choose_batch_tile(B)
    Bp = -(-B // TB) * TB
    if Bp != B:
        xT = jnp.pad(xT, ((0, 0), (0, Bp - B)))
        packedT = jnp.pad(packedT, ((0, 0), (0, Bp - B)))
    grid = (Bp // TB,)

    def col_spec(rows):
        # Tiled over the batch (lane) axis.
        return pl.BlockSpec((rows, TB), lambda i: (0, i))

    def resident(rows, cols):
        # Same block every grid step -> stays resident in VMEM.
        return pl.BlockSpec((rows, cols), lambda i: (0, 0))

    outT = pl.pallas_call(
        actor_kernel,
        out_shape=jax.ShapeDtypeStruct((out_dim, Bp), jnp.float32),
        grid=grid,
        in_specs=[
            col_spec(in_dim),          # x^T          (tiled over batch)
            col_spec(n_words),         # packed dropout bits (tiled over batch)
            resident(H, in_dim),       # w1  (native (out, in) layout)
            resident(H, 1),            # b1
            resident(H, H),            # w2
            resident(H, 1),            # b2
            resident(out_dim, H),      # w3
            resident(out_dim, 1),      # b3
        ],
        out_specs=col_spec(out_dim),
        compiler_params=pltpu.CompilerParams(
            dimension_semantics=("parallel",)),
    )(xT, packedT, params["w1"], params["b1"], params["w2"], params["b2"],
      params["w3"], params["b3"])

    return outT[:, :B].T                                         # (B, out_dim)


def prepare_params(torch_layout_params):
    """One-time layout prep.  Weights stay in native PyTorch (out, in) layout
    (batch-in-lanes kernel consumes them directly); biases become (out, 1)
    columns so they broadcast over the lane (batch) axis."""
    p = torch_layout_params
    return {
        "w1": jnp.asarray(p["fc1_w"], jnp.float32),              # (H, in)
        "b1": jnp.asarray(p["fc1_b"], jnp.float32).reshape(-1, 1),
        "w2": jnp.asarray(p["fc2_w"], jnp.float32),              # (H, H)
        "b2": jnp.asarray(p["fc2_b"], jnp.float32).reshape(-1, 1),
        "w3": jnp.asarray(p["fc3_w"], jnp.float32),              # (out, H)
        "b3": jnp.asarray(p["fc3_b"], jnp.float32).reshape(-1, 1),
    }


def init_params(key, input_size, hidden_size, output_size):
    """Deterministic synthetic init (PyTorch Linear layout: weight (out, in))."""
    ks = jax.random.split(key, 6)

    def uniform_init(k, shape, fan_in):
        bound = 1.0 / jnp.sqrt(fan_in)
        return jax.random.uniform(k, shape, jnp.float32, -bound, bound)

    return {
        "fc1_w": uniform_init(ks[0], (hidden_size, input_size), input_size),
        "fc1_b": uniform_init(ks[1], (hidden_size,), input_size),
        "fc2_w": uniform_init(ks[2], (hidden_size, hidden_size), hidden_size),
        "fc2_b": uniform_init(ks[3], (hidden_size,), hidden_size),
        "fc3_w": uniform_init(ks[4], (output_size, hidden_size), hidden_size),
        "fc3_b": uniform_init(ks[5], (output_size,), hidden_size),
    }


if __name__ == "__main__":
    # CartPole-v1: observation dim 4, action dim 2.
    input_size, hidden_size, output_size = 4, 32, 2
    batch = 8

    key = jax.random.PRNGKey(0)
    k_params, k_x, k_drop = jax.random.split(key, 3)
    params = prepare_params(init_params(k_params, input_size, hidden_size,
                                        output_size))
    x = jax.random.normal(k_x, (batch, input_size), dtype=jnp.float32)

    logits = actor_forward(x, params, k_drop)
    jax.block_until_ready(logits)

    # Pure-JAX reference (same keep mask regenerated from the same key; this
    # also validates the bit pack/unpack round-trip).
    n_words = -(-hidden_size // 32)
    keep = jax.random.bernoulli(k_drop, 1.0 - DROPOUT_P,
                                (batch, n_words * 32))[:, :hidden_size]
    h1 = jnp.maximum(x @ params["w1"].T + params["b1"].T, 0.0)
    h2 = jnp.maximum(h1 @ params["w2"].T + params["b2"].T, 0.0)
    h2 = h2 * (keep.astype(jnp.float32) * KEEP_SCALE)
    ref = h2 @ params["w3"].T + params["b3"].T

    assert logits.shape == (batch, output_size)
    assert logits.dtype == jnp.float32
    # Tolerance accounts for TPU MXU default f32 matmul precision.
    assert jnp.allclose(logits, ref, atol=1e-2, rtol=1e-2)
    print("KERNEL_OK")
</pallas_src>

<mosaic_0001>
module attributes {stable_mosaic.version = 11 : i64} {
  func.func @actor_kernel(%arg0: i32, %arg1: memref<4x8xf32, #tpu.memory_space<vmem>>, %arg2: memref<1x8xi32, #tpu.memory_space<vmem>>, %arg3: memref<32x4xf32, #tpu.memory_space<vmem>>, %arg4: memref<32x1xf32, #tpu.memory_space<vmem>>, %arg5: memref<32x32xf32, #tpu.memory_space<vmem>>, %arg6: memref<32x1xf32, #tpu.memory_space<vmem>>, %arg7: memref<2x32xf32, #tpu.memory_space<vmem>>, %arg8: memref<2x1xf32, #tpu.memory_space<vmem>>, %arg9: memref<2x8xf32, #tpu.memory_space<vmem>>) attributes {dimension_semantics = [#tpu.dimension_semantics<parallel>], iteration_bounds = array<i64: 1>, scalar_prefetch = 0 : i64, scratch_operands = 0 : i64, tpu.core_type = #tpu.core_type<tc>, window_params = [{transform_indices = @transform_0, window_bounds = array<i64: 4, 8>}, {transform_indices = @transform_1, window_bounds = array<i64: 1, 8>}, {pipeline_mode = #tpu.pipeline_mode<synchronous>, transform_indices = @transform_2, window_bounds = array<i64: 32, 4>}, {pipeline_mode = #tpu.pipeline_mode<synchronous>, transform_indices = @transform_3, window_bounds = array<i64: 32, 1>}, {pipeline_mode = #tpu.pipeline_mode<synchronous>, transform_indices = @transform_4, window_bounds = array<i64: 32, 32>}, {pipeline_mode = #tpu.pipeline_mode<synchronous>, transform_indices = @transform_5, window_bounds = array<i64: 32, 1>}, {pipeline_mode = #tpu.pipeline_mode<synchronous>, transform_indices = @transform_6, window_bounds = array<i64: 2, 32>}, {pipeline_mode = #tpu.pipeline_mode<synchronous>, transform_indices = @transform_7, window_bounds = array<i64: 2, 1>}, {transform_indices = @transform_8, window_bounds = array<i64: 2, 8>}]} {
    %c0 = arith.constant 0 : index
    %c0_0 = arith.constant 0 : index
    %0 = vector.load %arg1[%c0, %c0_0] : memref<4x8xf32, #tpu.memory_space<vmem>>, vector<4x8xf32>
    %c0_1 = arith.constant 0 : index
    %c0_2 = arith.constant 0 : index
    %1 = vector.load %arg3[%c0_1, %c0_2] : memref<32x4xf32, #tpu.memory_space<vmem>>, vector<32x4xf32>
    %cst = arith.constant dense<0.000000e+00> : vector<32x8xf32>
    %2 = tpu.matmul %1, %0, %cst {dimension_numbers = #tpu.dot_dimension_numbers<[1], [0], [0], [1], [0, 0, 1, 1], [], []>} : vector<32x4xf32>, vector<4x8xf32>, vector<32x8xf32> -> vector<32x8xf32>
    %c0_3 = arith.constant 0 : index
    %c0_4 = arith.constant 0 : index
    %3 = vector.load %arg4[%c0_3, %c0_4] : memref<32x1xf32, #tpu.memory_space<vmem>>, vector<32x1xf32>
    %4 = vector.broadcast %3 : vector<32x1xf32> to vector<32x8xf32>
    %5 = arith.addf %2, %4 : vector<32x8xf32>
    %cst_5 = arith.constant 0.000000e+00 : f32
    %6 = vector.broadcast %cst_5 : f32 to vector<32x8xf32>
    %7 = arith.maximumf %5, %6 : vector<32x8xf32>
    %c0_6 = arith.constant 0 : index
    %c0_7 = arith.constant 0 : index
    %8 = vector.load %arg5[%c0_6, %c0_7] : memref<32x32xf32, #tpu.memory_space<vmem>>, vector<32x32xf32>
    %cst_8 = arith.constant dense<0.000000e+00> : vector<32x8xf32>
    %9 = tpu.matmul %8, %7, %cst_8 {dimension_numbers = #tpu.dot_dimension_numbers<[1], [0], [0], [1], [0, 0, 1, 1], [], []>} : vector<32x32xf32>, vector<32x8xf32>, vector<32x8xf32> -> vector<32x8xf32>
    %c0_9 = arith.constant 0 : index
    %c0_10 = arith.constant 0 : index
    %10 = vector.load %arg6[%c0_9, %c0_10] : memref<32x1xf32, #tpu.memory_space<vmem>>, vector<32x1xf32>
    %11 = vector.broadcast %10 : vector<32x1xf32> to vector<32x8xf32>
    %12 = arith.addf %9, %11 : vector<32x8xf32>
    %cst_11 = arith.constant 0.000000e+00 : f32
    %13 = vector.broadcast %cst_11 : f32 to vector<32x8xf32>
    %14 = arith.maximumf %12, %13 : vector<32x8xf32>
    %c0_12 = arith.constant 0 : index
    %c0_13 = arith.constant 0 : index
    %15 = vector.load %arg2[%c0_12, %c0_13] : memref<1x8xi32, #tpu.memory_space<vmem>>, vector<1x8xi32>
    %16 = tpu.iota {dimensions = array<i32: 0>} : vector<32x8xi32>
    %c32_i32 = arith.constant 32 : i32
    %c0_i32 = arith.constant 0 : i32
    %17 = arith.cmpi eq, %c32_i32, %c0_i32 : i32
    %c1_i32 = arith.constant 1 : i32
    %18 = arith.select %17, %c1_i32, %c32_i32 : i32
    %19 = vector.broadcast %18 : i32 to vector<32x8xi32>
    %20 = arith.remsi %16, %19 : vector<32x8xi32>
    %c0_i32_14 = arith.constant 0 : i32
    %21 = vector.broadcast %c0_i32_14 : i32 to vector<32x8xi32>
    %22 = arith.cmpi ne, %20, %21 : vector<32x8xi32>
    %c0_i32_15 = arith.constant 0 : i32
    %23 = vector.broadcast %c0_i32_15 : i32 to vector<32x8xi32>
    %24 = arith.cmpi slt, %20, %23 : vector<32x8xi32>
    %c0_i32_16 = arith.constant 0 : i32
    %25 = arith.cmpi slt, %18, %c0_i32_16 : i32
    %26 = vector.broadcast %25 : i1 to vector<32x8xi1>
    %27 = vector.broadcast %26 : vector<32x8xi1> to vector<32x8xi1>
    %28 = arith.xori %24, %27 : vector<32x8xi1>
    %29 = arith.andi %28, %22 : vector<32x8xi1>
    %30 = vector.broadcast %18 : i32 to vector<32x8xi32>
    %31 = arith.addi %20, %30 : vector<32x8xi32>
    %32 = arith.select %29, %31, %20 : vector<32x8xi1>, vector<32x8xi32>
    %33 = vector.broadcast %15 : vector<1x8xi32> to vector<32x8xi32>
    %34 = arith.shrui %33, %32 : vector<32x8xi32>
    %c1_i32_17 = arith.constant 1 : i32
    %35 = vector.broadcast %c1_i32_17 : i32 to vector<32x8xi32>
    %36 = arith.andi %34, %35 : vector<32x8xi32>
    %37 = arith.uitofp %36 : vector<32x8xi32> to vector<32x8xf32>
    %cst_18 = arith.constant 1.66666663 : f32
    %38 = vector.broadcast %cst_18 : f32 to vector<32x8xf32>
    %39 = arith.mulf %37, %38 : vector<32x8xf32>
    %40 = arith.mulf %14, %39 : vector<32x8xf32>
    %c0_19 = arith.constant 0 : index
    %c0_20 = arith.constant 0 : index
    %41 = vector.load %arg7[%c0_19, %c0_20] : memref<2x32xf32, #tpu.memory_space<vmem>>, vector<2x32xf32>
    %cst_21 = arith.constant dense<0.000000e+00> : vector<2x8xf32>
    %42 = tpu.matmul %41, %40, %cst_21 {dimension_numbers = #tpu.dot_dimension_numbers<[1], [0], [0], [1], [0, 0, 1, 1], [], []>} : vector<2x32xf32>, vector<32x8xf32>, vector<2x8xf32> -> vector<2x8xf32>
    %c0_22 = arith.constant 0 : index
    %c0_23 = arith.constant 0 : index
    %43 = vector.load %arg8[%c0_22, %c0_23] : memref<2x1xf32, #tpu.memory_space<vmem>>, vector<2x1xf32>
    %44 = vector.broadcast %43 : vector<2x1xf32> to vector<2x8xf32>
    %45 = arith.addf %42, %44 : vector<2x8xf32>
    %c0_24 = arith.constant 0 : index
    %c0_25 = arith.constant 0 : index
    %46 = vector.load %arg9[%c0_24, %c0_25] : memref<2x8xf32, #tpu.memory_space<vmem>>, vector<2x8xf32>
    tpu.vector_store %arg9[%c0_24, %c0_25], %45 {strides = array<i32>} : memref<2x8xf32, #tpu.memory_space<vmem>>, vector<2x8xf32>,
    return
  }
  func.func @transform_0(%arg0: i32) -> (i32, i32) {
    %c0_i32 = arith.constant 0 : i32
    %c0_i32_0 = arith.constant 0 : i32
    return %c0_i32, %arg0 : i32, i32
  }
  func.func @transform_1(%arg0: i32) -> (i32, i32) {
    %c0_i32 = arith.constant 0 : i32
    %c0_i32_0 = arith.constant 0 : i32
    return %c0_i32, %arg0 : i32, i32
  }
  func.func @transform_2(%arg0: i32) -> (i32, i32) {
    %c0_i32 = arith.constant 0 : i32
    %c0_i32_0 = arith.constant 0 : i32
    %c0_i32_1 = arith.constant 0 : i32
    return %c0_i32, %c0_i32_0 : i32, i32
  }
  func.func @transform_3(%arg0: i32) -> (i32, i32) {
    %c0_i32 = arith.constant 0 : i32
    %c0_i32_0 = arith.constant 0 : i32
    %c0_i32_1 = arith.constant 0 : i32
    return %c0_i32, %c0_i32_0 : i32, i32
  }
  func.func @transform_4(%arg0: i32) -> (i32, i32) {
    %c0_i32 = arith.constant 0 : i32
    %c0_i32_0 = arith.constant 0 : i32
    %c0_i32_1 = arith.constant 0 : i32
    return %c0_i32, %c0_i32_0 : i32, i32
  }
  func.func @transform_5(%arg0: i32) -> (i32, i32) {
    %c0_i32 = arith.constant 0 : i32
    %c0_i32_0 = arith.constant 0 : i32
    %c0_i32_1 = arith.constant 0 : i32
    return %c0_i32, %c0_i32_0 : i32, i32
  }
  func.func @transform_6(%arg0: i32) -> (i32, i32) {
    %c0_i32 = arith.constant 0 : i32
    %c0_i32_0 = arith.constant 0 : i32
    %c0_i32_1 = arith.constant 0 : i32
    return %c0_i32, %c0_i32_0 : i32, i32
  }
  func.func @transform_7(%arg0: i32) -> (i32, i32) {
    %c0_i32 = arith.constant 0 : i32
    %c0_i32_0 = arith.constant 0 : i32
    %c0_i32_1 = arith.constant 0 : i32
    return %c0_i32, %c0_i32_0 : i32, i32
  }
  func.func @transform_8(%arg0: i32) -> (i32, i32) {
    %c0_i32 = arith.constant 0 : i32
    %c0_i32_0 = arith.constant 0 : i32
    return %c0_i32, %arg0 : i32, i32
  }
}

</mosaic_0001>

<llo_original>
// kernel: actor_forward.1
$region0: #{actor_forward.1}
  #allocation0 [shape = 'u32[]', space=smem, size = 0x4, offset = 0x4, fixed_abs, tag = 'smem constant byte address 0x4 - core index']
  #allocation1 [shape = 'u32[144,128]{1,0:T(1,128)}', space=vmem, size = 0x12000, scoped, tag = 'internal scratch']
  %s0 = inlined_call_operand.vmem [shape: f32[4,8], index: 0, kind: input, shape index: {}]
  %s1 = inlined_call_operand.vmem [shape: u32[1,8], index: 1, kind: input, shape index: {}]
  %s2 = inlined_call_operand.vmem [shape: f32[32,4], index: 2, kind: input, shape index: {}]
  %s3 = inlined_call_operand.vmem [shape: f32[32,1], index: 3, kind: input, shape index: {}]
  %s4 = inlined_call_operand.vmem [shape: f32[32,32], index: 4, kind: input, shape index: {}]
  %s5 = inlined_call_operand.vmem [shape: f32[32,1], index: 5, kind: input, shape index: {}]
  %s6 = inlined_call_operand.vmem [shape: f32[2,32], index: 6, kind: input, shape index: {}]
  %s7 = inlined_call_operand.vmem [shape: f32[2,1], index: 7, kind: input, shape index: {}]
  %s8 = inlined_call_operand.hbm [shape: f32[2,8], index: 8, kind: output, shape index: {}]
  %s9 = sld [smem:[#allocation0]]
  $region42: #{actor_forward.1} parent=0
    _
  %s11 = ssub.s32 1, %s9
  %s12 = scalar_select 0, %s11, %s9
  $region1: #{actor_forward.1} parent=0
    #allocation2 [shape = 'u8[1024]{0}', space=vmem, size = 0x400, scoped, tag = 'output window, operand 0, single buffered']
    #allocation3 [shape = 's32[1]{0}', space=sflag, size = 0x4, scoped, tag = 'scoped memory for actor_forward.1']
    %13 = vsyncpa [#allocation3], 0
    // Predicated region
    $region2: #{actor_forward.1} parent=1 // pred_check
      _
    $region3: #{actor_forward.1} parent=1 // pred_check_branch
      %15 = sbr.rel (0) target = $region5
    $region4: #{actor_forward.1} parent=1 // pred_region
      _
    $region5: #{actor_forward.1} parent=1 // pred_fallthru
      _
    // Predicated region
    $region6: #{actor_forward.1} parent=1 // pred_check
      _
    $region7: #{actor_forward.1} parent=1 // pred_check_branch
      %17 = sbr.rel (0) target = $region9
    $region8: #{actor_forward.1} parent=1 // pred_region
      _
    $region9: #{actor_forward.1} parent=1 // pred_fallthru
      _
    // Predicated region
    $region10: #{actor_forward.1} parent=1 // pred_check
      _
    $region11: #{actor_forward.1} parent=1 // pred_check_branch
      %19 = sbr.rel (0) target = $region13
    $region12: #{actor_forward.1} parent=1 // pred_region
      _
    $region13: #{actor_forward.1} parent=1 // pred_fallthru
      _
    // Predicated region
    $region14: #{actor_forward.1} parent=1 // pred_check
      _
    $region15: #{actor_forward.1} parent=1 // pred_check_branch
      %21 = sbr.rel (0) target = $region17
    $region16: #{actor_forward.1} parent=1 // pred_region
      _
    $region17: #{actor_forward.1} parent=1 // pred_fallthru
      _
    // Predicated region
    $region18: #{actor_forward.1} parent=1 // pred_check
      _
    $region19: #{actor_forward.1} parent=1 // pred_check_branch
      %23 = sbr.rel (0) target = $region21
    $region20: #{actor_forward.1} parent=1 // pred_region
      _
    $region21: #{actor_forward.1} parent=1 // pred_fallthru
      _
    // Predicated region
    $region22: #{actor_forward.1} parent=1 // pred_check
      _
    $region23: #{actor_forward.1} parent=1 // pred_check_branch
      %25 = sbr.rel (0) target = $region25
    $region24: #{actor_forward.1} parent=1 // pred_region
      _
    $region25: #{actor_forward.1} parent=1 // pred_fallthru
      _
    // Predicated region
    $region26: #{actor_forward.1} parent=1 // pred_check
      _
    $region27: #{actor_forward.1} parent=1 // pred_check_branch
      %27 = sbr.rel (0) target = $region29
    $region28: #{actor_forward.1} parent=1 // pred_region
      _
    $region29: #{actor_forward.1} parent=1 // pred_fallthru
      _
    // Predicated region
    $region30: #{actor_forward.1} parent=1 // pred_check
      _
    $region31: #{actor_forward.1} parent=1 // pred_check_branch
      %29 = sbr.rel (0) target = $region33
    $region32: #{actor_forward.1} parent=1 // pred_region
      _
    $region33: #{actor_forward.1} parent=1 // pred_fallthru
      _
    %v30 = vld [vmem:[%s0] sm:$0xf]
    %v31 = vld [vmem:[%s2] sm:$0xff]
    %v32 = vld [vmem:[%s2 + $0x8] sm:$0xff]
    %v33 = vld [vmem:[%s2 + $0x10] sm:$0xff]
    %v34 = vld [vmem:[%s2 + $0x18] sm:$0xff]
    %v35 = vld [vmem:[%s3] sm:$0xff]
    %v36 = vld [vmem:[%s3 + $0x8] sm:$0xff]
    %v37 = vld [vmem:[%s3 + $0x10] sm:$0xff]
    %v38 = vld [vmem:[%s3 + $0x18] sm:$0xff]
    %40 = vset.pattern.permute.xlu0 0
    %41 = vperm.xlu0 %40, %v35
    %v42 = vpop.permute.xlu0 %41
    %45 = vset.pattern.permute.xlu0 0
    %46 = vperm.xlu0 %45, %v36
    %v47 = vpop.permute.xlu0 %46
    %50 = vset.pattern.permute.xlu0 0
    %51 = vperm.xlu0 %50, %v37
    %v52 = vpop.permute.xlu0 %51
    %55 = vset.pattern.permute.xlu0 0
    %56 = vperm.xlu0 %55, %v38
    %v57 = vpop.permute.xlu0 %56
    %vm59 = vcmask 31744
    %v61 = vsel %vm59, %v31, 0
    %v64 = vsel %vm59, %v32, 0
    %v67 = vsel %vm59, %v33, 0
    %v70 = vsel %vm59, %v34, 0
    %vm72 = vcmask 1043456
    %v74 = vsel %vm72, %v30, 0
    %76 = vmatprep.subr.mxu0 0.0
    %77 = vmatpush1.msra.mxu0 0.0
    %78 = vmatprep.subr.mxu0 0.0
    %79 = vmatpush1.msra.mxu0 0.0
    %80 = vmatprep.subr.mxu0 0.0
    %81 = vmatpush1.msra.mxu0 0.0
    %82 = vmatprep.subr.mxu0 0.0
    %83 = vmatpush1.msra.mxu0 0.0
    %84 = vmatprep.subr.mxu0 0.0
    %85 = vmatpush1.msra.mxu0 0.0
    %86 = vmatprep.subr.mxu0 0.0
    %87 = vmatpush1.msra.mxu0 0.0
    %88 = vmatprep.subr.mxu0 0.0
    %89 = vmatpush1.msra.mxu0 0.0
    %90 = vmatprep.subr.mxu0 0.0
    %91 = vmatpush1.msra.mxu0 0.0
    %92 = vmatprep.subr.mxu0 0.0
    %93 = vmatpush1.msra.mxu0 0.0
    %94 = vmatprep.subr.mxu0 0.0
    %95 = vmatpush1.msra.mxu0 0.0
    %96 = vmatprep.subr.mxu0 0.0
    %97 = vmatpush1.msra.mxu0 0.0
    %98 = vmatprep.subr.mxu0 0.0
    %99 = vmatpush1.msra.mxu0 0.0
    %100 = vmatprep.subr.mxu0 0.0
    %101 = vmatpush1.msra.mxu0 0.0
    %102 = vmatprep.subr.mxu0 0.0
    %103 = vmatpush1.msra.mxu0 0.0
    %104 = vmatprep.subr.mxu0 0.0
    %105 = vmatpush1.msra.mxu0 0.0
    %106 = vmatprep.subr.mxu0 0.0
    %107 = vmatpush1.msra.mxu0 %v74
    %108 = vmatprep.subr.mxu0 0.0
    %109 = vmatpush2.msra.mxu0 0.0
    %110 = vmatprep.subr.mxu0 0.0
    %111 = vmatpush2.msra.mxu0 0.0
    %112 = vmatprep.subr.mxu0 0.0
    %113 = vmatpush2.msra.mxu0 0.0
    %114 = vmatprep.subr.mxu0 0.0
    %115 = vmatpush2.msra.mxu0 0.0
    %116 = vmatprep.subr.mxu0 0.0
    %117 = vmatpush2.msra.mxu0 0.0
    %118 = vmatprep.subr.mxu0 0.0
    %119 = vmatpush2.msra.mxu0 0.0
    %120 = vmatprep.subr.mxu0 0.0
    %121 = vmatpush2.msra.mxu0 0.0
    %122 = vmatprep.subr.mxu0 0.0
    %123 = vmatpush2.msra.mxu0 0.0
    %124 = vmatprep.subr.mxu0 0.0
    %125 = vmatpush2.msra.mxu0 0.0
    %126 = vmatprep.subr.mxu0 0.0
    %127 = vmatpush2.msra.mxu0 0.0
    %128 = vmatprep.subr.mxu0 0.0
    %129 = vmatpush2.msra.mxu0 0.0
    %130 = vmatprep.subr.mxu0 0.0
    %131 = vmatpush2.msra.mxu0 0.0
    %132 = vmatprep.subr.mxu0 0.0
    %133 = vmatpush2.msra.mxu0 0.0
    %134 = vmatprep.subr.mxu0 0.0
    %135 = vmatpush2.msra.mxu0 0.0
    %136 = vmatprep.subr.mxu0 0.0
    %137 = vmatpush2.msra.mxu0 0.0
    %138 = vmatprep.subr.mxu0 0.0
    %139 = vmatpush2.msra.mxu0 0.0
    %140 = vmatprep.mubr.f32.mxu0 0.0
    %141 = vmatmul.mubr.f32.gmra.mxu0 %v61
    %v142 = vpop.f32.mrf.mxu0
    %v143 = vadd.f32 %v42, %v142
    %v144 = vpop.f32.mrf.mxu0
    %145 = vmatprep.mubr.f32.mxu0 0.0
    %146 = vmatmul.mubr.f32.gmra.mxu0 %v64
    %v147 = vpop.f32.mrf.mxu0
    %v148 = vadd.f32 %v47, %v147
    %v149 = vpop.f32.mrf.mxu0
    %150 = vmatprep.mubr.f32.mxu0 0.0
    %151 = vmatmul.mubr.f32.gmra.mxu0 %v67
    %v152 = vpop.f32.mrf.mxu0
    %v153 = vadd.f32 %v52, %v152
    %v154 = vpop.f32.mrf.mxu0
    %155 = vmatprep.mubr.f32.mxu0 0.0
    %156 = vmatmul.mubr.f32.gmra.mxu0 %v70
    %v157 = vpop.f32.mrf.mxu0
    %v158 = vadd.f32 %v57, %v157
    %v159 = vpop.f32.mrf.mxu0
    %160 = vdwg.mxu0
    %v161 = vmax.f32 %v143, 0.0
    %v162 = vmax.f32 %v148, 0.0
    %v163 = vmax.f32 %v153, 0.0
    %v164 = vmax.f32 %v158, 0.0
    %v165 = vld [vmem:[%s4] sm:$0xff]
    %v166 = vld [vmem:[%s4 + $0x8] sm:$0xff]
    %v167 = vld [vmem:[%s4 + $0x10] sm:$0xff]
    %v168 = vld [vmem:[%s4 + $0x18] sm:$0xff]
    %v169 = vld [vmem:[%s5] sm:$0xff]
    %v170 = vld [vmem:[%s5 + $0x8] sm:$0xff]
    %v171 = vld [vmem:[%s5 + $0x10] sm:$0xff]
    %v172 = vld [vmem:[%s5 + $0x18] sm:$0xff]
    %174 = vset.pattern.permute.xlu0 0
    %175 = vperm.xlu0 %174, %v169
    %v176 = vpop.permute.xlu0 %175
    %179 = vset.pattern.permute.xlu0 0
    %180 = vperm.xlu0 %179, %v170
    %v181 = vpop.permute.xlu0 %180
    %184 = vset.pattern.permute.xlu0 0
    %185 = vperm.xlu0 %184, %v171
    %v186 = vpop.permute.xlu0 %185
    %189 = vset.pattern.permute.xlu0 0
    %190 = vperm.xlu0 %189, %v172
    %v191 = vpop.permute.xlu0 %190
    %vm193 = vcmask 261120
    %v195 = vsel %vm193, %v165, 0
    %v198 = vsel %vm193, %v166, 0
    %v201 = vsel %vm193, %v167, 0
    %v204 = vsel %vm193, %v168, 0
    %206 = vmatprep.subr.mxu0 0.0
    %207 = vmatpush1.msra.mxu0 0.0
    %208 = vmatprep.subr.mxu0 0.0
    %209 = vmatpush1.msra.mxu0 0.0
    %210 = vmatprep.subr.mxu0 0.0
    %211 = vmatpush1.msra.mxu0 0.0
    %212 = vmatprep.subr.mxu0 0.0
    %213 = vmatpush1.msra.mxu0 0.0
    %214 = vmatprep.subr.mxu0 0.0
    %215 = vmatpush1.msra.mxu0 0.0
    %216 = vmatprep.subr.mxu0 0.0
    %217 = vmatpush1.msra.mxu0 0.0
    %218 = vmatprep.subr.mxu0 0.0
    %219 = vmatpush1.msra.mxu0 0.0
    %220 = vmatprep.subr.mxu0 0.0
    %221 = vmatpush1.msra.mxu0 0.0
    %222 = vmatprep.subr.mxu0 0.0
    %223 = vmatpush1.msra.mxu0 0.0
    %224 = vmatprep.subr.mxu0 0.0
    %225 = vmatpush1.msra.mxu0 0.0
    %226 = vmatprep.subr.mxu0 0.0
    %227 = vmatpush1.msra.mxu0 0.0
    %228 = vmatprep.subr.mxu0 0.0
    %229 = vmatpush1.msra.mxu0 0.0
    %230 = vmatprep.subr.mxu0 0.0
    %231 = vmatpush1.msra.mxu0 %v164
    %232 = vmatprep.subr.mxu0 0.0
    %233 = vmatpush1.msra.mxu0 %v163
    %234 = vmatprep.subr.mxu0 0.0
    %235 = vmatpush1.msra.mxu0 %v162
    %236 = vmatprep.subr.mxu0 0.0
    %237 = vmatpush1.msra.mxu0 %v161
    %238 = vmatprep.subr.mxu0 0.0
    %239 = vmatpush2.msra.mxu0 0.0
    %240 = vmatprep.subr.mxu0 0.0
    %241 = vmatpush2.msra.mxu0 0.0
    %242 = vmatprep.subr.mxu0 0.0
    %243 = vmatpush2.msra.mxu0 0.0
    %244 = vmatprep.subr.mxu0 0.0
    %245 = vmatpush2.msra.mxu0 0.0
    %246 = vmatprep.subr.mxu0 0.0
    %247 = vmatpush2.msra.mxu0 0.0
    %248 = vmatprep.subr.mxu0 0.0
    %249 = vmatpush2.msra.mxu0 0.0
    %250 = vmatprep.subr.mxu0 0.0
    %251 = vmatpush2.msra.mxu0 0.0
    %252 = vmatprep.subr.mxu0 0.0
    %253 = vmatpush2.msra.mxu0 0.0
    %254 = vmatprep.subr.mxu0 0.0
    %255 = vmatpush2.msra.mxu0 0.0
    %256 = vmatprep.subr.mxu0 0.0
    %257 = vmatpush2.msra.mxu0 0.0
    %258 = vmatprep.subr.mxu0 0.0
    %259 = vmatpush2.msra.mxu0 0.0
    %260 = vmatprep.subr.mxu0 0.0
    %261 = vmatpush2.msra.mxu0 0.0
    %262 = vmatprep.subr.mxu0 0.0
    %263 = vmatpush2.msra.mxu0 0.0
    %264 = vmatprep.subr.mxu0 0.0
    %265 = vmatpush2.msra.mxu0 0.0
    %266 = vmatprep.subr.mxu0 0.0
    %267 = vmatpush2.msra.mxu0 0.0
    %268 = vmatprep.subr.mxu0 0.0
    %269 = vmatpush2.msra.mxu0 0.0
    %270 = vmatprep.mubr.f32.mxu0 0.0
    %271 = vmatmul.mubr.f32.gmra.mxu0 %v195
    %v272 = vpop.f32.mrf.mxu0
    %v273 = vadd.f32 %v176, %v272
    %v274 = vpop.f32.mrf.mxu0
    %275 = vmatprep.mubr.f32.mxu0 0.0
    %276 = vmatmul.mubr.f32.gmra.mxu0 %v198
    %v277 = vpop.f32.mrf.mxu0
    %v278 = vadd.f32 %v181, %v277
    %v279 = vpop.f32.mrf.mxu0
    %280 = vmatprep.mubr.f32.mxu0 0.0
    %281 = vmatmul.mubr.f32.gmra.mxu0 %v201
    %v282 = vpop.f32.mrf.mxu0
    %v283 = vadd.f32 %v186, %v282
    %v284 = vpop.f32.mrf.mxu0
    %285 = vmatprep.mubr.f32.mxu0 0.0
    %286 = vmatmul.mubr.f32.gmra.mxu0 %v204
    %v287 = vpop.f32.mrf.mxu0
    %v288 = vadd.f32 %v191, %v287
    %v289 = vpop.f32.mrf.mxu0
    %290 = vdwg.mxu0
    %v291 = vmax.f32 %v273, 0.0
    %v292 = vmax.f32 %v278, 0.0
    %v293 = vmax.f32 %v283, 0.0
    %v294 = vmax.f32 %v288, 0.0
    %v295 = vld [vmem:[%s1] sm:$0x1]
    %v296 = vlaneseq
    %v297 = vshrl.u32 %v296, 7
    %v298 = vadd.s32 %v297, 8
    %v299 = vadd.s32 %v297, 16
    %v300 = vadd.s32 %v297, 24
    %vm301 = vcmp.lt.s32.totalorder %v297, 0
    %v302 = vsub.s32 0, %v297
    %v303 = vsel %vm301, %v302, %v297
    %v304 = vshrl.u32 %v303, 5
    %v305 = vand.u32 %v303, 31
    %v306 = vsub.s32 0, %v305
    %v307 = vsel %vm301, %v306, %v305
    %vm308 = vcmp.lt.s32.totalorder %v298, 0
    %v309 = vsub.s32 0, %v298
    %v310 = vsel %vm308, %v309, %v298
    %v311 = vshrl.u32 %v310, 5
    %v312 = vand.u32 %v310, 31
    %v313 = vsub.s32 0, %v312
    %v314 = vsel %vm308, %v313, %v312
    %vm315 = vcmp.lt.s32.totalorder %v299, 0
    %v316 = vsub.s32 0, %v299
    %v317 = vsel %vm315, %v316, %v299
    %v318 = vshrl.u32 %v317, 5
    %v319 = vand.u32 %v317, 31
    %v320 = vsub.s32 0, %v319
    %v321 = vsel %vm315, %v320, %v319
    %vm322 = vcmp.lt.s32.totalorder %v300, 0
    %v323 = vsub.s32 0, %v300
    %v324 = vsel %vm322, %v323, %v300
    %v325 = vshrl.u32 %v324, 5
    %v326 = vand.u32 %v324, 31
    %v327 = vsub.s32 0, %v326
    %v328 = vsel %vm322, %v327, %v326
    %vm329 = vcmp.ne.s32.totalorder %v307, 0
    %vm330 = vcmp.ne.s32.totalorder %v314, 0
    %vm331 = vcmp.ne.s32.totalorder %v321, 0
    %vm332 = vcmp.ne.s32.totalorder %v328, 0
    %vm333 = vcmp.lt.s32.totalorder %v307, 0
    %vm334 = vcmp.lt.s32.totalorder %v314, 0
    %vm335 = vcmp.lt.s32.totalorder %v321, 0
    %vm336 = vcmp.lt.s32.totalorder %v328, 0
    %vm337 = vmand %vm333, %vm329
    %vm338 = vmand %vm334, %vm330
    %vm339 = vmand %vm335, %vm331
    %vm340 = vmand %vm336, %vm332
    %v341 = vadd.s32 %v307, 32
    %v342 = vadd.s32 %v314, 32
    %v343 = vadd.s32 %v321, 32
    %v344 = vadd.s32 %v328, 32
    %v345 = vsel %vm337, %v341, %v307
    %v346 = vsel %vm338, %v342, %v314
    %v347 = vsel %vm339, %v343, %v321
    %v348 = vsel %vm340, %v344, %v328
    %v349 = vlaneseq
    %v350 = vshrl.u32 %v349, 7
    %v351 = vsub.s32 0, %v350
    %v352 = vrot.slane %v295, %v351
    %v353 = vshrl.u32 %v352, %v345
    %v354 = vshrl.u32 %v352, %v346
    %v355 = vshrl.u32 %v352, %v347
    %v356 = vshrl.u32 %v352, %v348
    %v357 = vand.u32 %v353, 1
    %v358 = vand.u32 %v354, 1
    %v359 = vand.u32 %v355, 1
    %v360 = vand.u32 %v356, 1
    %v361 = vshrl.u32 %v357, 16
    %v362 = vand.u32 %v357, 65535
    %v363 = vcvt.s32.f32 %v361
    %v364 = vmul.f32 %v363, 65536.0
    %v365 = vcvt.s32.f32 %v362
    %v366 = vadd.f32 %v364, %v365
    %v367 = vshrl.u32 %v358, 16
    %v368 = vand.u32 %v358, 65535
    %v369 = vcvt.s32.f32 %v367
    %v370 = vmul.f32 %v369, 65536.0
    %v371 = vcvt.s32.f32 %v368
    %v372 = vadd.f32 %v370, %v371
    %v373 = vshrl.u32 %v359, 16
    %v374 = vand.u32 %v359, 65535
    %v375 = vcvt.s32.f32 %v373
    %v376 = vmul.f32 %v375, 65536.0
    %v377 = vcvt.s32.f32 %v374
    %v378 = vadd.f32 %v376, %v377
    %v379 = vshrl.u32 %v360, 16
    %v380 = vand.u32 %v360, 65535
    %v381 = vcvt.s32.f32 %v379
    %v382 = vmul.f32 %v381, 65536.0
    %v383 = vcvt.s32.f32 %v380
    %v384 = vadd.f32 %v382, %v383
    %v385 = vmul.f32 %v366, 1.6666666
    %v386 = vmul.f32 %v372, 1.6666666
    %v387 = vmul.f32 %v378, 1.6666666
    %v388 = vmul.f32 %v384, 1.6666666
    %v389 = vmul.f32 %v291, %v385
    %v390 = vmul.f32 %v292, %v386
    %v391 = vmul.f32 %v293, %v387
    %v392 = vmul.f32 %v294, %v388
    %v393 = vld [vmem:[%s6] sm:$0x3]
    %v394 = vld [vmem:[%s7] sm:$0x3]
    %396 = vset.pattern.permute.xlu0 0
    %397 = vperm.xlu0 %396, %v394
    %v398 = vpop.permute.xlu0 %397
    %v401 = vsel %vm193, %v393, 0
    %403 = vmatprep.subr.mxu0 0.0
    %404 = vmatpush1.msra.mxu0 0.0
    %405 = vmatprep.subr.mxu0 0.0
    %406 = vmatpush1.msra.mxu0 0.0
    %407 = vmatprep.subr.mxu0 0.0
    %408 = vmatpush1.msra.mxu0 0.0
    %409 = vmatprep.subr.mxu0 0.0
    %410 = vmatpush1.msra.mxu0 0.0
    %411 = vmatprep.subr.mxu0 0.0
    %412 = vmatpush1.msra.mxu0 0.0
    %413 = vmatprep.subr.mxu0 0.0
    %414 = vmatpush1.msra.mxu0 0.0
    %415 = vmatprep.subr.mxu0 0.0
    %416 = vmatpush1.msra.mxu0 0.0
    %417 = vmatprep.subr.mxu0 0.0
    %418 = vmatpush1.msra.mxu0 0.0
    %419 = vmatprep.subr.mxu0 0.0
    %420 = vmatpush1.msra.mxu0 0.0
    %421 = vmatprep.subr.mxu0 0.0
    %422 = vmatpush1.msra.mxu0 0.0
    %423 = vmatprep.subr.mxu0 0.0
    %424 = vmatpush1.msra.mxu0 0.0
    %425 = vmatprep.subr.mxu0 0.0
    %426 = vmatpush1.msra.mxu0 0.0
    %427 = vmatprep.subr.mxu0 0.0
    %428 = vmatpush1.msra.mxu0 %v392
    %429 = vmatprep.subr.mxu0 0.0
    %430 = vmatpush1.msra.mxu0 %v391
    %431 = vmatprep.subr.mxu0 0.0
    %432 = vmatpush1.msra.mxu0 %v390
    %433 = vmatprep.subr.mxu0 0.0
    %434 = vmatpush1.msra.mxu0 %v389
    %435 = vmatprep.subr.mxu0 0.0
    %436 = vmatpush2.msra.mxu0 0.0
    %437 = vmatprep.subr.mxu0 0.0
    %438 = vmatpush2.msra.mxu0 0.0
    %439 = vmatprep.subr.mxu0 0.0
    %440 = vmatpush2.msra.mxu0 0.0
    %441 = vmatprep.subr.mxu0 0.0
    %442 = vmatpush2.msra.mxu0 0.0
    %443 = vmatprep.subr.mxu0 0.0
    %444 = vmatpush2.msra.mxu0 0.0
    %445 = vmatprep.subr.mxu0 0.0
    %446 = vmatpush2.msra.mxu0 0.0
    %447 = vmatprep.subr.mxu0 0.0
    %448 = vmatpush2.msra.mxu0 0.0
    %449 = vmatprep.subr.mxu0 0.0
    %450 = vmatpush2.msra.mxu0 0.0
    %451 = vmatprep.subr.mxu0 0.0
    %452 = vmatpush2.msra.mxu0 0.0
    %453 = vmatprep.subr.mxu0 0.0
    %454 = vmatpush2.msra.mxu0 0.0
    %455 = vmatprep.subr.mxu0 0.0
    %456 = vmatpush2.msra.mxu0 0.0
    %457 = vmatprep.subr.mxu0 0.0
    %458 = vmatpush2.msra.mxu0 0.0
    %459 = vmatprep.subr.mxu0 0.0
    %460 = vmatpush2.msra.mxu0 0.0
    %461 = vmatprep.subr.mxu0 0.0
    %462 = vmatpush2.msra.mxu0 0.0
    %463 = vmatprep.subr.mxu0 0.0
    %464 = vmatpush2.msra.mxu0 0.0
    %465 = vmatprep.subr.mxu0 0.0
    %466 = vmatpush2.msra.mxu0 0.0
    %467 = vmatprep.mubr.f32.mxu0 0.0
    %468 = vmatmul.mubr.f32.gmra.mxu0 %v401
    %v469 = vpop.f32.mrf.mxu0
    %v470 = vadd.f32 %v398, %v469
    %v471 = vpop.f32.mrf.mxu0
    %472 = vdwg.mxu0
    %vm473 = vcmask 58368
    %474 = vst.msk [vmem:[#allocation2] sm:$0x3] %vm473, %v470
    // Predicated region
    $region34: #{actor_forward.1} parent=1 // pred_check
      _
    $region35: #{actor_forward.1} parent=1 // pred_check_branch
      %476 = sbr.rel (0) target = $region37
    $region36: #{actor_forward.1} parent=1 // pred_region
      %s478 = ssub.s32 32, 32
      %479 = vsyncadd [#allocation3], %s478
      %s481 = sshll.u32 [#allocation2], 4
      %s482 = int_to_ptr.vmem [resolvable:$true] %s481
      %484 = dma.vmem_to_hbm [thread:$0]  %s482, 32, %s8, [#allocation3]
    $region37: #{actor_forward.1} parent=1 // pred_fallthru
      _
    // Predicated region
    $region38: #{actor_forward.1} parent=1 // pred_check
      _
    $region39: #{actor_forward.1} parent=1 // pred_check_branch
      %486 = sbr.rel (0) target = $region41
    $region40: #{actor_forward.1} parent=1 // pred_region
      %487 = dma.done [#allocation3], 32
    $region41: #{actor_forward.1} parent=1 // pred_fallthru
      _
    %488 = vsyncpa [#allocation3], 1

</llo_original>
